<compile_context>
chip_gen: v5e
topology: v5e:2x2
jax: 0.10.0
libtpu: 0.0.40
codegen_flags: <defaults>
</compile_context>

<pallas_src>
import jax
import jax.numpy as jnp
from jax import lax
from jax.experimental import pallas as pl
from jax.experimental.pallas import tpu as pltpu

MIB = 1024 * 1024


def mlp_kernel(x_ref, w1_ref, b1_ref, w2_ref, b2_ref, w3_ref, b3_ref,
               w4_ref, b4_ref, o_ref):
    # x tile arrives in natural (tile_b, F) f32 layout; cast to bf16 at the MXU operand.
    x_bf16 = x_ref[...].astype(w1_ref.dtype)                       # (tb, F)

    # Layer 1: contract F of w1 (128, F) with F of x (tb, F) -> (128, tb) f32 accum.
    h = lax.dot_general(w1_ref[...], x_bf16,
                        dimension_numbers=(((1,), (1,)), ((), ())),
                        preferred_element_type=jnp.float32)
    h = jnp.maximum(h + b1_ref[...], 0.0)
    # Dropout(0.3): identity in eval mode.

    # Layer 2: (64, 128) @ (128, tb); cast activation to bf16 only at the dot operand.
    h = jnp.dot(w2_ref[...], h.astype(w2_ref.dtype),
                preferred_element_type=jnp.float32)
    h = jnp.maximum(h + b2_ref[...], 0.0)
    # Dropout(0.3): identity in eval mode.

    # Layer 3: (32, 64) @ (64, tb).
    h = jnp.dot(w3_ref[...], h.astype(w3_ref.dtype),
                preferred_element_type=jnp.float32)
    h = jnp.maximum(h + b3_ref[...], 0.0)

    # Layer 4 (32 -> 1): VPU multiply + sublane (XLU) reduction instead of a
    # 1-column MXU pass; b4 is a scalar read from SMEM.  Lane-dense (1, tb) row.
    out_row = jnp.sum(w4_ref[...] * h, axis=0, keepdims=True) + b4_ref[0, 0]
    o_ref[...] = out_row.astype(o_ref.dtype)


def _round_up(n, m):
    return ((n + m - 1) // m) * m


def _vmem_budget_bytes():
    """Generation-aware VMEM budget for the streamed batch tiles."""
    try:
        vmem = int(pltpu.get_tpu_info().vmem_capacity_bytes)
    except Exception:
        vmem = 64 * MIB                       # conservative: assume v7x-sized VMEM
    if vmem <= 64 * MIB:                      # v7x: 64 MiB physical / 32 MiB scoped
        return 24 * MIB
    return 48 * MIB                           # v5e / v6e: 128 MiB physical per TC


def _plan_tiles(B, F, requested_tile_b, budget):
    """Pick a lane-dense batch tile (multiple of 128) and a right-sized VMEM limit."""
    n_xbuf = 3 if F >= 1024 else 2            # extra x buffer only in the DMA-bound regime
    # Resident (constant index-map) blocks: double-buffered bf16 w1 + small weights/biases.
    resident = 2 * (2 * 128 * F) + 64 * 1024
    # Per batch-column bytes: f32 x stream buffers, its bf16 cast, f32 activations
    # (128+64+32 rows), bf16 operand copies for layers 2/3, double-buffered f32 out row.
    per_col = n_xbuf * 4 * F + 2 * F + 4 * (128 + 64 + 32) + 2 * (128 + 64) + 2 * 4
    avail = max(budget - resident, 128 * per_col)
    cap = max(128, (avail // per_col) // 128 * 128)
    tile = max(128, (min(requested_tile_b, cap) // 128) * 128)
    b128 = _round_up(B, 128)
    tile = min(tile, b128)
    if b128 >= 256:                           # keep >=2 grid steps (v7x megacore)
        tile = min(tile, max(128, ((b128 // 2) // 128) * 128))
    footprint = resident + per_col * tile
    vmem_limit = int(max(16 * MIB, min(footprint + 8 * MIB, budget + 8 * MIB)))
    return tile, vmem_limit, n_xbuf


def regression_model_forward(x, params, *, tile_b=4096, compute_dtype=jnp.bfloat16):
    """x: (B, F) float32. params: PyTorch-layout weights (out, in), biases (out, 1).
    Returns (B, 1) float32."""
    B, F = x.shape
    budget = _vmem_budget_bytes()
    tile_b, vmem_limit, n_xbuf = _plan_tiles(B, F, tile_b, budget)
    B_pad = _round_up(B, tile_b)
    if B_pad != B:
        x = jnp.pad(x, ((0, B_pad - B), (0, 0)))
    num_tiles = B_pad // tile_b

    w1 = params["w1"].astype(compute_dtype)                # (128, F) bf16
    w2 = params["w2"].astype(compute_dtype)                # (64, 128) bf16
    w3 = params["w3"].astype(compute_dtype)                # (32, 64)  bf16
    b1, b2, b3 = params["b1"], params["b2"], params["b3"]  # f32 columns (out, 1)
    w4 = params["w4"].reshape(32, 1).astype(jnp.float32)   # f32, used on the VPU/XLU
    b4 = params["b4"].reshape(1, 1).astype(jnp.float32)    # scalar -> SMEM

    if F >= 1024:
        x_spec = pl.BlockSpec((tile_b, F), lambda i: (i, 0),
                              pipeline_mode=pl.Buffered(n_xbuf))
    else:
        x_spec = pl.BlockSpec((tile_b, F), lambda i: (i, 0))

    full = lambda arr: pl.BlockSpec(arr.shape, lambda i: (0, 0))

    flops = 2 * B_pad * (F * 128 + 128 * 64 + 64 * 32 + 32)
    bytes_accessed = (x.size * 4 + (w1.size + w2.size + w3.size) * 2
                      + (b1.size + b2.size + b3.size + w4.size + b4.size) * 4
                      + B_pad * 4)

    out = pl.pallas_call(
        mlp_kernel,
        out_shape=jax.ShapeDtypeStruct((1, B_pad), jnp.float32),
        grid_spec=pltpu.PrefetchScalarGridSpec(
            num_scalar_prefetch=0,
            grid=(num_tiles,),
            in_specs=[
                x_spec,                                     # streamed batch tile (f32)
                full(w1), full(b1),
                full(w2), full(b2),
                full(w3), full(b3),
                full(w4),
                pl.BlockSpec(memory_space=pltpu.MemorySpace.SMEM),  # b4 scalar
            ],
            out_specs=pl.BlockSpec((1, tile_b), lambda i: (0, i)),  # lane-dense row
        ),
        compiler_params=pltpu.CompilerParams(
            dimension_semantics=("parallel",),   # lets v7x shard grid steps across 2 TCs
            vmem_limit_bytes=vmem_limit),
        cost_estimate=pl.CostEstimate(
            flops=flops, transcendentals=0, bytes_accessed=bytes_accessed),
    )(x, w1, b1, w2, b2, w3, b3, w4, b4)

    flat = out.reshape(B_pad)
    if B_pad != B:
        flat = lax.slice(flat, (0,), (B,))
    return flat.reshape(B, 1)


def init_params(key, input_size):
    """PyTorch nn.Linear layout: weight (out_features, in_features); bias kept as a
    (out_features, 1) column (convenient for the transposed kernel layout)."""
    sizes = [(input_size, 128), (128, 64), (64, 32), (32, 1)]
    params = {}
    for idx, (fan_in, fan_out) in enumerate(sizes, start=1):
        key, kw, kb = jax.random.split(key, 3)
        bound = 1.0 / (fan_in ** 0.5)
        params[f"w{idx}"] = jax.random.uniform(
            kw, (fan_out, fan_in), jnp.float32, -bound, bound)
        params[f"b{idx}"] = jax.random.uniform(
            kb, (fan_out, 1), jnp.float32, -bound, bound)
    return params


def reference_forward(x, params, compute_dtype=jnp.bfloat16):
    """Same math as the kernel: bf16 MXU operands, f32 accumulation, f32 final layer."""
    cd = compute_dtype

    def lin(h, w, b):
        return (jnp.dot(h.astype(cd), w.T.astype(cd),
                        preferred_element_type=jnp.float32) + b.reshape(1, -1))

    h = jnp.maximum(lin(x, params["w1"], params["b1"]), 0.0)
    h = jnp.maximum(lin(h, params["w2"], params["b2"]), 0.0)
    h = jnp.maximum(lin(h, params["w3"], params["b3"]), 0.0)
    return (jnp.dot(h, params["w4"].T, preferred_element_type=jnp.float32)
            + params["b4"].reshape(1, -1))


if __name__ == "__main__":
    key = jax.random.PRNGKey(0)
    input_size = 32
    batch = 256   # tile planner caps tile_b at 128 here -> 2 grid steps (megacore path)

    key, kx, kp = jax.random.split(key, 3)
    x = jax.random.normal(kx, (batch, input_size), jnp.float32)
    params = init_params(kp, input_size)

    out = regression_model_forward(x, params)
    out = jax.block_until_ready(out)

    ref = reference_forward(x, params)
    assert out.shape == (batch, 1)
    assert jnp.allclose(out, ref, atol=2e-3, rtol=2e-3), "mismatch vs reference"

    print("KERNEL_OK")
</pallas_src>

<mosaic_0001>
module attributes {stable_mosaic.version = 11 : i64} {
  func.func @mlp_kernel(%arg0: i32, %arg1: memref<128x32xf32, #tpu.memory_space<vmem>>, %arg2: memref<128x32xbf16, #tpu.memory_space<vmem>>, %arg3: memref<128x1xf32, #tpu.memory_space<vmem>>, %arg4: memref<64x128xbf16, #tpu.memory_space<vmem>>, %arg5: memref<64x1xf32, #tpu.memory_space<vmem>>, %arg6: memref<32x64xbf16, #tpu.memory_space<vmem>>, %arg7: memref<32x1xf32, #tpu.memory_space<vmem>>, %arg8: memref<32x1xf32, #tpu.memory_space<vmem>>, %arg9: memref<1x1xf32, #tpu.memory_space<smem>>, %arg10: memref<1x128xf32, #tpu.memory_space<vmem>>) attributes {dimension_semantics = [#tpu.dimension_semantics<parallel>], iteration_bounds = array<i64: 2>, scalar_prefetch = 0 : i64, scratch_operands = 0 : i64, tpu.core_type = #tpu.core_type<tc>, window_params = [{transform_indices = @transform_0, window_bounds = array<i64: 128, 32>}, {pipeline_mode = #tpu.pipeline_mode<synchronous>, transform_indices = @transform_1, window_bounds = array<i64: 128, 32>}, {pipeline_mode = #tpu.pipeline_mode<synchronous>, transform_indices = @transform_2, window_bounds = array<i64: 128, 1>}, {pipeline_mode = #tpu.pipeline_mode<synchronous>, transform_indices = @transform_3, window_bounds = array<i64: 64, 128>}, {pipeline_mode = #tpu.pipeline_mode<synchronous>, transform_indices = @transform_4, window_bounds = array<i64: 64, 1>}, {pipeline_mode = #tpu.pipeline_mode<synchronous>, transform_indices = @transform_5, window_bounds = array<i64: 32, 64>}, {pipeline_mode = #tpu.pipeline_mode<synchronous>, transform_indices = @transform_6, window_bounds = array<i64: 32, 1>}, {pipeline_mode = #tpu.pipeline_mode<synchronous>, transform_indices = @transform_7, window_bounds = array<i64: 32, 1>}, {transform_indices = @transform_8, window_bounds = array<i64: 1, 1>}, {transform_indices = @transform_9, window_bounds = array<i64: 1, 128>}]} {
    %c0 = arith.constant 0 : index
    %c0_0 = arith.constant 0 : index
    %0 = vector.load %arg1[%c0, %c0_0] : memref<128x32xf32, #tpu.memory_space<vmem>>, vector<128x32xf32>
    %1 = arith.truncf %0 : vector<128x32xf32> to vector<128x32xbf16>
    %c0_1 = arith.constant 0 : index
    %c0_2 = arith.constant 0 : index
    %2 = vector.load %arg2[%c0_1, %c0_2] : memref<128x32xbf16, #tpu.memory_space<vmem>>, vector<128x32xbf16>
    %cst = arith.constant dense<0.000000e+00> : vector<128x128xf32>
    %3 = tpu.matmul %2, %1, %cst {dimension_numbers = #tpu.dot_dimension_numbers<[1], [1], [0], [0], [0, 0, 1, 0], [], []>} : vector<128x32xbf16>, vector<128x32xbf16>, vector<128x128xf32> -> vector<128x128xf32>
    %c0_3 = arith.constant 0 : index
    %c0_4 = arith.constant 0 : index
    %4 = vector.load %arg3[%c0_3, %c0_4] : memref<128x1xf32, #tpu.memory_space<vmem>>, vector<128x1xf32>
    %5 = vector.broadcast %4 : vector<128x1xf32> to vector<128x128xf32>
    %6 = arith.addf %3, %5 : vector<128x128xf32>
    %cst_5 = arith.constant 0.000000e+00 : f32
    %7 = vector.broadcast %cst_5 : f32 to vector<128x128xf32>
    %8 = arith.maximumf %6, %7 : vector<128x128xf32>
    %c0_6 = arith.constant 0 : index
    %c0_7 = arith.constant 0 : index
    %9 = vector.load %arg4[%c0_6, %c0_7] : memref<64x128xbf16, #tpu.memory_space<vmem>>, vector<64x128xbf16>
    %10 = arith.truncf %8 : vector<128x128xf32> to vector<128x128xbf16>
    %cst_8 = arith.constant dense<0.000000e+00> : vector<64x128xf32>
    %11 = tpu.matmul %9, %10, %cst_8 {dimension_numbers = #tpu.dot_dimension_numbers<[1], [0], [0], [1], [0, 0, 1, 1], [], []>} : vector<64x128xbf16>, vector<128x128xbf16>, vector<64x128xf32> -> vector<64x128xf32>
    %c0_9 = arith.constant 0 : index
    %c0_10 = arith.constant 0 : index
    %12 = vector.load %arg5[%c0_9, %c0_10] : memref<64x1xf32, #tpu.memory_space<vmem>>, vector<64x1xf32>
    %13 = vector.broadcast %12 : vector<64x1xf32> to vector<64x128xf32>
    %14 = arith.addf %11, %13 : vector<64x128xf32>
    %cst_11 = arith.constant 0.000000e+00 : f32
    %15 = vector.broadcast %cst_11 : f32 to vector<64x128xf32>
    %16 = arith.maximumf %14, %15 : vector<64x128xf32>
    %c0_12 = arith.constant 0 : index
    %c0_13 = arith.constant 0 : index
    %17 = vector.load %arg6[%c0_12, %c0_13] : memref<32x64xbf16, #tpu.memory_space<vmem>>, vector<32x64xbf16>
    %18 = arith.truncf %16 : vector<64x128xf32> to vector<64x128xbf16>
    %cst_14 = arith.constant dense<0.000000e+00> : vector<32x128xf32>
    %19 = tpu.matmul %17, %18, %cst_14 {dimension_numbers = #tpu.dot_dimension_numbers<[1], [0], [0], [1], [0, 0, 1, 1], [], []>} : vector<32x64xbf16>, vector<64x128xbf16>, vector<32x128xf32> -> vector<32x128xf32>
    %c0_15 = arith.constant 0 : index
    %c0_16 = arith.constant 0 : index
    %20 = vector.load %arg7[%c0_15, %c0_16] : memref<32x1xf32, #tpu.memory_space<vmem>>, vector<32x1xf32>
    %21 = vector.broadcast %20 : vector<32x1xf32> to vector<32x128xf32>
    %22 = arith.addf %19, %21 : vector<32x128xf32>
    %cst_17 = arith.constant 0.000000e+00 : f32
    %23 = vector.broadcast %cst_17 : f32 to vector<32x128xf32>
    %24 = arith.maximumf %22, %23 : vector<32x128xf32>
    %c0_18 = arith.constant 0 : index
    %c0_19 = arith.constant 0 : index
    %25 = vector.load %arg8[%c0_18, %c0_19] : memref<32x1xf32, #tpu.memory_space<vmem>>, vector<32x1xf32>
    %26 = vector.broadcast %25 : vector<32x1xf32> to vector<32x128xf32>
    %27 = arith.mulf %26, %24 : vector<32x128xf32>
    %cst_20 = arith.constant dense<0.000000e+00> : vector<128xf32>
    %28 = vector.multi_reduction <add>, %27, %cst_20 [0] : vector<32x128xf32> to vector<128xf32>
    %29 = vector.shape_cast %28 : vector<128xf32> to vector<1x128xf32>
    %c0_21 = arith.constant 0 : index
    %c0_22 = arith.constant 0 : index
    %30 = memref.load %arg9[%c0_21, %c0_22] : memref<1x1xf32, #tpu.memory_space<smem>>
    %31 = vector.broadcast %30 : f32 to vector<1x128xf32>
    %32 = arith.addf %29, %31 : vector<1x128xf32>
    %c0_23 = arith.constant 0 : index
    %c0_24 = arith.constant 0 : index
    %33 = vector.load %arg10[%c0_23, %c0_24] : memref<1x128xf32, #tpu.memory_space<vmem>>, vector<1x128xf32>
    tpu.vector_store %arg10[%c0_23, %c0_24], %32 {strides = array<i32>} : memref<1x128xf32, #tpu.memory_space<vmem>>, vector<1x128xf32>,
    return
  }
  func.func @transform_0(%arg0: i32) -> (i32, i32) {
    %c0_i32 = arith.constant 0 : i32
    %c0_i32_0 = arith.constant 0 : i32
    return %arg0, %c0_i32 : i32, i32
  }
  func.func @transform_1(%arg0: i32) -> (i32, i32) {
    %c0_i32 = arith.constant 0 : i32
    %c0_i32_0 = arith.constant 0 : i32
    %c0_i32_1 = arith.constant 0 : i32
    return %c0_i32, %c0_i32_0 : i32, i32
  }
  func.func @transform_2(%arg0: i32) -> (i32, i32) {
    %c0_i32 = arith.constant 0 : i32
    %c0_i32_0 = arith.constant 0 : i32
    %c0_i32_1 = arith.constant 0 : i32
    return %c0_i32, %c0_i32_0 : i32, i32
  }
  func.func @transform_3(%arg0: i32) -> (i32, i32) {
    %c0_i32 = arith.constant 0 : i32
    %c0_i32_0 = arith.constant 0 : i32
    %c0_i32_1 = arith.constant 0 : i32
    return %c0_i32, %c0_i32_0 : i32, i32
  }
  func.func @transform_4(%arg0: i32) -> (i32, i32) {
    %c0_i32 = arith.constant 0 : i32
    %c0_i32_0 = arith.constant 0 : i32
    %c0_i32_1 = arith.constant 0 : i32
    return %c0_i32, %c0_i32_0 : i32, i32
  }
  func.func @transform_5(%arg0: i32) -> (i32, i32) {
    %c0_i32 = arith.constant 0 : i32
    %c0_i32_0 = arith.constant 0 : i32
    %c0_i32_1 = arith.constant 0 : i32
    return %c0_i32, %c0_i32_0 : i32, i32
  }
  func.func @transform_6(%arg0: i32) -> (i32, i32) {
    %c0_i32 = arith.constant 0 : i32
    %c0_i32_0 = arith.constant 0 : i32
    %c0_i32_1 = arith.constant 0 : i32
    return %c0_i32, %c0_i32_0 : i32, i32
  }
  func.func @transform_7(%arg0: i32) -> (i32, i32) {
    %c0_i32 = arith.constant 0 : i32
    %c0_i32_0 = arith.constant 0 : i32
    %c0_i32_1 = arith.constant 0 : i32
    return %c0_i32, %c0_i32_0 : i32, i32
  }
  func.func @transform_8(%arg0: i32) -> (i32, i32) {
    %c0_i32 = arith.constant 0 : i32
    %c0_i32_0 = arith.constant 0 : i32
    %c0_i32_1 = arith.constant 0 : i32
    return %c0_i32, %c0_i32_0 : i32, i32
  }
  func.func @transform_9(%arg0: i32) -> (i32, i32) {
    %c0_i32 = arith.constant 0 : i32
    %c0_i32_0 = arith.constant 0 : i32
    return %c0_i32, %arg0 : i32, i32
  }
}

</mosaic_0001>

<llo_original>
// kernel: tpu_custom_call.1
$region0: #{tpu_custom_call.1}
  #allocation0 [shape = 'u32[]', space=smem, size = 0x4, offset = 0x4, fixed_abs, tag = 'smem constant byte address 0x4 - core index']
  #allocation1 [shape = 'u32[72,128]{1,0:T(1,128)}', space=vmem, size = 0x9000, scoped, tag = 'internal scratch']
  #allocation2 [shape = 'f32[1,1]{1,0:T(1,128)S(6)}', space=smem, size = 0x200, scoped, tag = 'scoped memory for tpu_custom_call.1']
  %s0 = inlined_call_operand.vmem [shape: f32[256,32], index: 0, kind: input, shape index: {}]
  %s1 = inlined_call_operand.vmem [shape: bf16[128,32], index: 1, kind: input, shape index: {}]
  %s2 = inlined_call_operand.vmem [shape: f32[128,1], index: 2, kind: input, shape index: {}]
  %s3 = inlined_call_operand.vmem [shape: bf16[64,128], index: 3, kind: input, shape index: {}]
  %s4 = inlined_call_operand.vmem [shape: f32[64,1], index: 4, kind: input, shape index: {}]
  %s5 = inlined_call_operand.vmem [shape: bf16[32,64], index: 5, kind: input, shape index: {}]
  %s6 = inlined_call_operand.vmem [shape: f32[32,1], index: 6, kind: input, shape index: {}]
  %s7 = inlined_call_operand.vmem [shape: f32[32,1], index: 7, kind: input, shape index: {}]
  %s8 = inlined_call_operand.<no memory space> [shape: f32[1,1], index: 8, kind: input, shape index: {}]
  %s9 = inlined_call_operand.hbm [shape: f32[1,256], index: 9, kind: output, shape index: {}]
  %s10 = sld [smem:[#allocation0]]
  $region69: #{tpu_custom_call.1} parent=0
    _
  %s12 = ssub.s32 1, %s10
  %s13 = scalar_select 0, %s12, %s10
  %14 = sst [smem:[#allocation2]] %s8
  $region1: #{tpu_custom_call.1} parent=0
    #allocation3 [shape = 'u8[1024]{0}', space=vmem, size = 0x400, scoped, tag = 'output window, operand 0']
    #allocation4 [shape = 's32[2]{0}', space=sflag, size = 0x8, scoped, tag = 'scoped memory for tpu_custom_call.1']
    %15 = vsyncpa [#allocation4], 0
    %s16 = scalar_lea.sflag [#allocation4], 1
    %17 = vsyncpa %s16, 0
    loop: start=0, step=1, limit=4
    $region2: #{tpu_custom_call.1} parent=1 // loop_pre_header
      _
    $region3: #{tpu_custom_call.1} parent=1 // loop_header
      %s19 = sphi 0, %s23
      %p20 = scmp.ge.s32.totalorder %s19, 4
      %s29 = sphi 0, %s31
      %s32 = sphi 0, %s29
      %s33 = sphi 0, %s32
      %s49 = sphi 0, %s33
      %s53 = sphi 0, %s53
      %s55 = sphi 0, %s53
      %s56 = sphi 0, %s55
      %s70 = sphi 0, %s56
      %s74 = sphi 0, %s74
      %s76 = sphi 0, %s74
      %s77 = sphi 0, %s76
      %s91 = sphi 0, %s77
      %s95 = sphi 0, %s95
      %s97 = sphi 0, %s95
      %s98 = sphi 0, %s97
      %s112 = sphi 0, %s98
      %s116 = sphi 0, %s116
      %s118 = sphi 0, %s116
      %s119 = sphi 0, %s118
      %s133 = sphi 0, %s119
      %s137 = sphi 0, %s137
      %s139 = sphi 0, %s137
      %s140 = sphi 0, %s139
      %s154 = sphi 0, %s140
      %s158 = sphi 0, %s158
      %s160 = sphi 0, %s158
      %s161 = sphi 0, %s160
      %s175 = sphi 0, %s161
      %s179 = sphi 0, %s179
      %s181 = sphi 0, %s179
      %s182 = sphi 0, %s181
      %s196 = sphi 0, %s182
      %s200 = sphi 0, %s200
      %s202 = sphi 0, %s200
      %s203 = sphi 0, %s202
      %s217 = sphi 0, %s203
      %s223 = sphi 0, %s225
      %s226 = sphi 0, %s223
      %s227 = sphi 0, %s226
      %s243 = sphi 0, %s227
    $region4: #{tpu_custom_call.1} parent=1 // loop_header_branch
      %22 = sbr.rel (%p20) target = $region8
    $region5: #{tpu_custom_call.1} parent=1 // loop_body
      %s24 = ssub.s32 %s19, 1
      %s25 = ssub.s32 %s19, 2
      %s26 = sadd.s32 %s19, 1
      %s27 = ssub.s32 %s19, %s26
      %p28 = scmp.eq.s32.totalorder %s27, 0
      %s30 = sadd.s32 %s29, 1
      %s31 = scalar_select %p28, %s29, %s30
      %p34 = pneg %p28
      %p35 = scmp.eq.s32.totalorder %s19, 1
      %p36 = por %p34, %p35
      %p37 = scmp.ne.s32.totalorder %s29, %s32
      %p38 = scmp.eq.s32.totalorder %s19, 0
      %p39 = por %p37, %p38
      %p40 = scmp.ne.s32.totalorder %s29, %s32
      %p41 = scmp.eq.s32.totalorder %s24, 1
      %p42 = por %p40, %p41
      %p43 = scmp.ne.s32.totalorder %s32, %s33
      %p44 = scmp.eq.s32.totalorder %s24, 0
      %p45 = por %p43, %p44
      %p46 = scmp.ne.s32.totalorder %s32, %s33
      %p47 = scmp.eq.s32.totalorder %s25, 1
      %p48 = por %p46, %p47
      %p50 = scmp.ne.s32.totalorder %s33, %s49
      %p51 = scmp.eq.s32.totalorder %s25, 0
      %p52 = por %p50, %p51
      %s54 = sadd.s32 %s53, 1
      %p57 = scmp.eq.s32.totalorder %s19, 1
      %p58 = scmp.ne.s32.totalorder %s53, %s55
      %p59 = scmp.eq.s32.totalorder %s19, 0
      %p60 = por %p58, %p59
      %p61 = scmp.ne.s32.totalorder %s53, %s55
      %p62 = scmp.eq.s32.totalorder %s24, 1
      %p63 = por %p61, %p62
      %p64 = scmp.ne.s32.totalorder %s55, %s56
      %p65 = scmp.eq.s32.totalorder %s24, 0
      %p66 = por %p64, %p65
      %p67 = scmp.ne.s32.totalorder %s55, %s56
      %p68 = scmp.eq.s32.totalorder %s25, 1
      %p69 = por %p67, %p68
      %p71 = scmp.ne.s32.totalorder %s56, %s70
      %p72 = scmp.eq.s32.totalorder %s25, 0
      %p73 = por %p71, %p72
      %s75 = sadd.s32 %s74, 1
      %p78 = scmp.eq.s32.totalorder %s19, 1
      %p79 = scmp.ne.s32.totalorder %s74, %s76
      %p80 = scmp.eq.s32.totalorder %s19, 0
      %p81 = por %p79, %p80
      %p82 = scmp.ne.s32.totalorder %s74, %s76
      %p83 = scmp.eq.s32.totalorder %s24, 1
      %p84 = por %p82, %p83
      %p85 = scmp.ne.s32.totalorder %s76, %s77
      %p86 = scmp.eq.s32.totalorder %s24, 0
      %p87 = por %p85, %p86
      %p88 = scmp.ne.s32.totalorder %s76, %s77
      %p89 = scmp.eq.s32.totalorder %s25, 1
      %p90 = por %p88, %p89
      %p92 = scmp.ne.s32.totalorder %s77, %s91
      %p93 = scmp.eq.s32.totalorder %s25, 0
      %p94 = por %p92, %p93
      %s96 = sadd.s32 %s95, 1
      %p99 = scmp.eq.s32.totalorder %s19, 1
      %p100 = scmp.ne.s32.totalorder %s95, %s97
      %p101 = scmp.eq.s32.totalorder %s19, 0
      %p102 = por %p100, %p101
      %p103 = scmp.ne.s32.totalorder %s95, %s97
      %p104 = scmp.eq.s32.totalorder %s24, 1
      %p105 = por %p103, %p104
      %p106 = scmp.ne.s32.totalorder %s97, %s98
      %p107 = scmp.eq.s32.totalorder %s24, 0
      %p108 = por %p106, %p107
      %p109 = scmp.ne.s32.totalorder %s97, %s98
      %p110 = scmp.eq.s32.totalorder %s25, 1
      %p111 = por %p109, %p110
      %p113 = scmp.ne.s32.totalorder %s98, %s112
      %p114 = scmp.eq.s32.totalorder %s25, 0
      %p115 = por %p113, %p114
      %s117 = sadd.s32 %s116, 1
      %p120 = scmp.eq.s32.totalorder %s19, 1
      %p121 = scmp.ne.s32.totalorder %s116, %s118
      %p122 = scmp.eq.s32.totalorder %s19, 0
      %p123 = por %p121, %p122
      %p124 = scmp.ne.s32.totalorder %s116, %s118
      %p125 = scmp.eq.s32.totalorder %s24, 1
      %p126 = por %p124, %p125
      %p127 = scmp.ne.s32.totalorder %s118, %s119
      %p128 = scmp.eq.s32.totalorder %s24, 0
      %p129 = por %p127, %p128
      %p130 = scmp.ne.s32.totalorder %s118, %s119
      %p131 = scmp.eq.s32.totalorder %s25, 1
      %p132 = por %p130, %p131
      %p134 = scmp.ne.s32.totalorder %s119, %s133
      %p135 = scmp.eq.s32.totalorder %s25, 0
      %p136 = por %p134, %p135
      %s138 = sadd.s32 %s137, 1
      %p141 = scmp.eq.s32.totalorder %s19, 1
      %p142 = scmp.ne.s32.totalorder %s137, %s139
      %p143 = scmp.eq.s32.totalorder %s19, 0
      %p144 = por %p142, %p143
      %p145 = scmp.ne.s32.totalorder %s137, %s139
      %p146 = scmp.eq.s32.totalorder %s24, 1
      %p147 = por %p145, %p146
      %p148 = scmp.ne.s32.totalorder %s139, %s140
      %p149 = scmp.eq.s32.totalorder %s24, 0
      %p150 = por %p148, %p149
      %p151 = scmp.ne.s32.totalorder %s139, %s140
      %p152 = scmp.eq.s32.totalorder %s25, 1
      %p153 = por %p151, %p152
      %p155 = scmp.ne.s32.totalorder %s140, %s154
      %p156 = scmp.eq.s32.totalorder %s25, 0
      %p157 = por %p155, %p156
      %s159 = sadd.s32 %s158, 1
      %p162 = scmp.eq.s32.totalorder %s19, 1
      %p163 = scmp.ne.s32.totalorder %s158, %s160
      %p164 = scmp.eq.s32.totalorder %s19, 0
      %p165 = por %p163, %p164
      %p166 = scmp.ne.s32.totalorder %s158, %s160
      %p167 = scmp.eq.s32.totalorder %s24, 1
      %p168 = por %p166, %p167
      %p169 = scmp.ne.s32.totalorder %s160, %s161
      %p170 = scmp.eq.s32.totalorder %s24, 0
      %p171 = por %p169, %p170
      %p172 = scmp.ne.s32.totalorder %s160, %s161
      %p173 = scmp.eq.s32.totalorder %s25, 1
      %p174 = por %p172, %p173
      %p176 = scmp.ne.s32.totalorder %s161, %s175
      %p177 = scmp.eq.s32.totalorder %s25, 0
      %p178 = por %p176, %p177
      %s180 = sadd.s32 %s179, 1
      %p183 = scmp.eq.s32.totalorder %s19, 1
      %p184 = scmp.ne.s32.totalorder %s179, %s181
      %p185 = scmp.eq.s32.totalorder %s19, 0
      %p186 = por %p184, %p185
      %p187 = scmp.ne.s32.totalorder %s179, %s181
      %p188 = scmp.eq.s32.totalorder %s24, 1
      %p189 = por %p187, %p188
      %p190 = scmp.ne.s32.totalorder %s181, %s182
      %p191 = scmp.eq.s32.totalorder %s24, 0
      %p192 = por %p190, %p191
      %p193 = scmp.ne.s32.totalorder %s181, %s182
      %p194 = scmp.eq.s32.totalorder %s25, 1
      %p195 = por %p193, %p194
      %p197 = scmp.ne.s32.totalorder %s182, %s196
      %p198 = scmp.eq.s32.totalorder %s25, 0
      %p199 = por %p197, %p198
      %s201 = sadd.s32 %s200, 1
      %p204 = scmp.eq.s32.totalorder %s19, 1
      %p205 = scmp.ne.s32.totalorder %s200, %s202
      %p206 = scmp.eq.s32.totalorder %s19, 0
      %p207 = por %p205, %p206
      %p208 = scmp.ne.s32.totalorder %s200, %s202
      %p209 = scmp.eq.s32.totalorder %s24, 1
      %p210 = por %p208, %p209
      %p211 = scmp.ne.s32.totalorder %s202, %s203
      %p212 = scmp.eq.s32.totalorder %s24, 0
      %p213 = por %p211, %p212
      %p214 = scmp.ne.s32.totalorder %s202, %s203
      %p215 = scmp.eq.s32.totalorder %s25, 1
      %p216 = por %p214, %p215
      %p218 = scmp.ne.s32.totalorder %s203, %s217
      %p219 = scmp.eq.s32.totalorder %s25, 0
      %p220 = por %p218, %p219
      %s221 = ssub.s32 %s19, %s26
      %p222 = scmp.eq.s32.totalorder %s221, 0
      %s224 = sadd.s32 %s223, 1
      %s225 = scalar_select %p222, %s223, %s224
      %p228 = pneg %p222
      %p229 = scmp.eq.s32.totalorder %s19, 1
      %p230 = por %p228, %p229
      %p231 = scmp.ne.s32.totalorder %s223, %s226
      %p232 = scmp.eq.s32.totalorder %s19, 0
      %p233 = por %p231, %p232
      %p234 = scmp.ne.s32.totalorder %s223, %s226
      %p235 = scmp.eq.s32.totalorder %s24, 1
      %p236 = por %p234, %p235
      %p237 = scmp.ne.s32.totalorder %s226, %s227
      %p238 = scmp.eq.s32.totalorder %s24, 0
      %p239 = por %p237, %p238
      %p240 = scmp.ne.s32.totalorder %s226, %s227
      %p241 = scmp.eq.s32.totalorder %s25, 1
      %p242 = por %p240, %p241
      %p244 = scmp.ne.s32.totalorder %s227, %s243
      %p245 = scmp.eq.s32.totalorder %s25, 0
      %p246 = por %p244, %p245
      %p247 = scmp.le.s32.totalorder 1, %s19
      %p248 = scmp.lt.s32.totalorder %s19, 3
      %p249 = pnand %p247, %p248
      %p250 = pneg %p249
      // Predicated region
      $region9: #{tpu_custom_call.1} parent=5 // pred_check
        _
      $region10: #{tpu_custom_call.1} parent=5 // pred_check_branch
        %252 = sbr.rel (%p249) target = $region12
      $region11: #{tpu_custom_call.1} parent=5 // pred_region
        %s253 = ssub.s32 %s19, 1
        // Predicated region
        $region13: #{tpu_custom_call.1} parent=11 // pred_check
          %p254 = pneg %p66
        $region14: #{tpu_custom_call.1} parent=11 // pred_check_branch
          %256 = sbr.rel (%p254) target = $region16
        $region15: #{tpu_custom_call.1} parent=11 // pred_region
          _
        $region16: #{tpu_custom_call.1} parent=11 // pred_fallthru
          _
        // Predicated region
        $region17: #{tpu_custom_call.1} parent=11 // pred_check
          %p257 = pneg %p87
        $region18: #{tpu_custom_call.1} parent=11 // pred_check_branch
          %259 = sbr.rel (%p257) target = $region20
        $region19: #{tpu_custom_call.1} parent=11 // pred_region
          _
        $region20: #{tpu_custom_call.1} parent=11 // pred_fallthru
          _
        // Predicated region
        $region21: #{tpu_custom_call.1} parent=11 // pred_check
          %p260 = pneg %p108
        $region22: #{tpu_custom_call.1} parent=11 // pred_check_branch
          %262 = sbr.rel (%p260) target = $region24
        $region23: #{tpu_custom_call.1} parent=11 // pred_region
          _
        $region24: #{tpu_custom_call.1} parent=11 // pred_fallthru
          _
        // Predicated region
        $region25: #{tpu_custom_call.1} parent=11 // pred_check
          %p263 = pneg %p129
        $region26: #{tpu_custom_call.1} parent=11 // pred_check_branch
          %265 = sbr.rel (%p263) target = $region28
        $region27: #{tpu_custom_call.1} parent=11 // pred_region
          _
        $region28: #{tpu_custom_call.1} parent=11 // pred_fallthru
          _
        // Predicated region
        $region29: #{tpu_custom_call.1} parent=11 // pred_check
          %p266 = pneg %p150
        $region30: #{tpu_custom_call.1} parent=11 // pred_check_branch
          %268 = sbr.rel (%p266) target = $region32
        $region31: #{tpu_custom_call.1} parent=11 // pred_region
          _
        $region32: #{tpu_custom_call.1} parent=11 // pred_fallthru
          _
        // Predicated region
        $region33: #{tpu_custom_call.1} parent=11 // pred_check
          %p269 = pneg %p171
        $region34: #{tpu_custom_call.1} parent=11 // pred_check_branch
          %271 = sbr.rel (%p269) target = $region36
        $region35: #{tpu_custom_call.1} parent=11 // pred_region
          _
        $region36: #{tpu_custom_call.1} parent=11 // pred_fallthru
          _
        // Predicated region
        $region37: #{tpu_custom_call.1} parent=11 // pred_check
          %p272 = pneg %p192
        $region38: #{tpu_custom_call.1} parent=11 // pred_check_branch
          %274 = sbr.rel (%p272) target = $region40
        $region39: #{tpu_custom_call.1} parent=11 // pred_region
          _
        $region40: #{tpu_custom_call.1} parent=11 // pred_fallthru
          _
        // Predicated region
        $region41: #{tpu_custom_call.1} parent=11 // pred_check
          %p275 = pneg %p213
        $region42: #{tpu_custom_call.1} parent=11 // pred_check_branch
          %277 = sbr.rel (%p275) target = $region44
        $region43: #{tpu_custom_call.1} parent=11 // pred_region
          _
        $region44: #{tpu_custom_call.1} parent=11 // pred_fallthru
          _
      $region12: #{tpu_custom_call.1} parent=5 // pred_fallthru
        _
      %p278 = scmp.lt.s32.totalorder %s19, 2
      // Predicated region
      $region45: #{tpu_custom_call.1} parent=5 // pred_check
        %p279 = pneg %p278
      $region46: #{tpu_custom_call.1} parent=5 // pred_check_branch
        %281 = sbr.rel (%p279) target = $region48
      $region47: #{tpu_custom_call.1} parent=5 // pred_region
        // Predicated region
        $region49: #{tpu_custom_call.1} parent=47 // pred_check
          %p282 = pneg %p39
        $region50: #{tpu_custom_call.1} parent=47 // pred_check_branch
          %284 = sbr.rel (%p282) target = $region52
        $region51: #{tpu_custom_call.1} parent=47 // pred_region
          %s285 = smul.u32 16, %s19
          %p286 = scmp.lt.s32.totalorder %s285, 31
          %s287 = scalar_select %p286, %s285, 31
          %s288 = smul.addr %s287, 8
          %s289 = scalar_lea.vmem %s0, %s288
          %s290 = smul.u32 16, %s19
        $region52: #{tpu_custom_call.1} parent=47 // pred_fallthru
          _
      $region48: #{tpu_custom_call.1} parent=5 // pred_fallthru
        _
      %p291 = scmp.le.s32.totalorder 1, %s19
      %p292 = scmp.lt.s32.totalorder %s19, 3
      %p293 = pnand %p291, %p292
      %p294 = pneg %p293
      // Predicated region
      $region53: #{tpu_custom_call.1} parent=5 // pred_check
        _
      $region54: #{tpu_custom_call.1} parent=5 // pred_check_branch
        %296 = sbr.rel (%p293) target = $region56
      $region55: #{tpu_custom_call.1} parent=5 // pred_region
        %s297 = ssub.s32 %s19, 1
        %s298 = smul.u32 16, %s24
        %p299 = scmp.lt.s32.totalorder %s298, 31
        %s300 = scalar_select %p299, %s298, 31
        %s301 = smul.addr %s300, 8
        %s302 = scalar_lea.vmem %s0, %s301
        %p303 = pneg %p45
        %p304 = pneg %p42
        %p305 = pneg %p66
        %p306 = pneg %p63
        %p307 = pneg %p87
        %p308 = pneg %p84
        %p309 = pneg %p108
        %p310 = pneg %p105
        %p311 = pneg %p129
        %p312 = pneg %p126
        %p313 = pneg %p150
        %p314 = pneg %p147
        %p315 = pneg %p171
        %p316 = pneg %p168
        %p317 = pneg %p192
        %p318 = pneg %p189
        %p319 = pneg %p213
        %p320 = pneg %p210
        %p321 = pneg %p239
        %p322 = pneg %p236
        %s323 = sand.u32 %s226, 1
        %s324 = scalar_lea.sflag [#allocation4], %s323
        %s325 = sand.u32 %s226, 1
        %s326 = scalar_lea.vmem [#allocation3], %s325
        %s327 = smul.u32 16, %s24
        %p328 = scmp.lt.s32.totalorder %s327, 31
        %s329 = scalar_select %p328, %s327, 31
        %s330 = smul.addr %s329, 8
        %s331 = scalar_lea.vmem %s0, %s330
        %s332 = smul.u32 16, %s24
        %v334 = vld [vmem:[%s331] sm:$0xff]
        %v335 = vld [vmem:[%s331 + $0x8] sm:$0xff]
        %v336 = vld [vmem:[%s331 + $0x10] sm:$0xff]
        %v337 = vld [vmem:[%s331 + $0x18] sm:$0xff]
        %v338 = vld [vmem:[%s331 + $0x20] sm:$0xff]
        %v339 = vld [vmem:[%s331 + $0x28] sm:$0xff]
        %v340 = vld [vmem:[%s331 + $0x30] sm:$0xff]
        %v341 = vld [vmem:[%s331 + $0x38] sm:$0xff]
        %v342 = vld [vmem:[%s331 + $0x40] sm:$0xff]
        %v343 = vld [vmem:[%s331 + $0x48] sm:$0xff]
        %v344 = vld [vmem:[%s331 + $0x50] sm:$0xff]
        %v345 = vld [vmem:[%s331 + $0x58] sm:$0xff]
        %v346 = vld [vmem:[%s331 + $0x60] sm:$0xff]
        %v347 = vld [vmem:[%s331 + $0x68] sm:$0xff]
        %v348 = vld [vmem:[%s331 + $0x70] sm:$0xff]
        %v349 = vld [vmem:[%s331 + $0x78] sm:$0xff]
        %v350 = vpack.c.bf16 %v335, %v334
        %v351 = vpack.c.bf16 %v337, %v336
        %v352 = vpack.c.bf16 %v339, %v338
        %v353 = vpack.c.bf16 %v341, %v340
        %v354 = vpack.c.bf16 %v343, %v342
        %v355 = vpack.c.bf16 %v345, %v344
        %v356 = vpack.c.bf16 %v347, %v346
        %v357 = vpack.c.bf16 %v349, %v348
        %v358 = vld [vmem:[%s1] sm:$0xf]
        %v359 = vld [vmem:[%s1 + $0x4] sm:$0xf]
        %v360 = vld [vmem:[%s1 + $0x8] sm:$0xf]
        %v361 = vld [vmem:[%s1 + $0xc] sm:$0xf]
        %v362 = vld [vmem:[%s1 + $0x10] sm:$0xf]
        %v363 = vld [vmem:[%s1 + $0x14] sm:$0xf]
        %v364 = vld [vmem:[%s1 + $0x18] sm:$0xf]
        %v365 = vld [vmem:[%s1 + $0x1c] sm:$0xf]
        %v366 = vld [vmem:[%s1 + $0x20] sm:$0xf]
        %v367 = vld [vmem:[%s1 + $0x24] sm:$0xf]
        %v368 = vld [vmem:[%s1 + $0x28] sm:$0xf]
        %v369 = vld [vmem:[%s1 + $0x2c] sm:$0xf]
        %v370 = vld [vmem:[%s1 + $0x30] sm:$0xf]
        %v371 = vld [vmem:[%s1 + $0x34] sm:$0xf]
        %v372 = vld [vmem:[%s1 + $0x38] sm:$0xf]
        %v373 = vld [vmem:[%s1 + $0x3c] sm:$0xf]
        %v374 = vld [vmem:[%s2] sm:$0xff]
        %v375 = vld [vmem:[%s2 + $0x8] sm:$0xff]
        %v376 = vld [vmem:[%s2 + $0x10] sm:$0xff]
        %v377 = vld [vmem:[%s2 + $0x18] sm:$0xff]
        %v378 = vld [vmem:[%s2 + $0x20] sm:$0xff]
        %v379 = vld [vmem:[%s2 + $0x28] sm:$0xff]
        %v380 = vld [vmem:[%s2 + $0x30] sm:$0xff]
        %v381 = vld [vmem:[%s2 + $0x38] sm:$0xff]
        %v382 = vld [vmem:[%s2 + $0x40] sm:$0xff]
        %v383 = vld [vmem:[%s2 + $0x48] sm:$0xff]
        %v384 = vld [vmem:[%s2 + $0x50] sm:$0xff]
        %v385 = vld [vmem:[%s2 + $0x58] sm:$0xff]
        %v386 = vld [vmem:[%s2 + $0x60] sm:$0xff]
        %v387 = vld [vmem:[%s2 + $0x68] sm:$0xff]
        %v388 = vld [vmem:[%s2 + $0x70] sm:$0xff]
        %v389 = vld [vmem:[%s2 + $0x78] sm:$0xff]
        %391 = vset.pattern.permute.xlu0 0
        %392 = vperm.xlu0 %391, %v374
        %v393 = vpop.permute.xlu0 %392
        %396 = vset.pattern.permute.xlu0 0
        %397 = vperm.xlu0 %396, %v375
        %v398 = vpop.permute.xlu0 %397
        %401 = vset.pattern.permute.xlu0 0
        %402 = vperm.xlu0 %401, %v376
        %v403 = vpop.permute.xlu0 %402
        %406 = vset.pattern.permute.xlu0 0
        %407 = vperm.xlu0 %406, %v377
        %v408 = vpop.permute.xlu0 %407
        %411 = vset.pattern.permute.xlu0 0
        %412 = vperm.xlu0 %411, %v378
        %v413 = vpop.permute.xlu0 %412
        %416 = vset.pattern.permute.xlu0 0
        %417 = vperm.xlu0 %416, %v379
        %v418 = vpop.permute.xlu0 %417
        %421 = vset.pattern.permute.xlu0 0
        %422 = vperm.xlu0 %421, %v380
        %v423 = vpop.permute.xlu0 %422
        %426 = vset.pattern.permute.xlu0 0
        %427 = vperm.xlu0 %426, %v381
        %v428 = vpop.permute.xlu0 %427
        %431 = vset.pattern.permute.xlu0 0
        %432 = vperm.xlu0 %431, %v382
        %v433 = vpop.permute.xlu0 %432
        %436 = vset.pattern.permute.xlu0 0
        %437 = vperm.xlu0 %436, %v383
        %v438 = vpop.permute.xlu0 %437
        %441 = vset.pattern.permute.xlu0 0
        %442 = vperm.xlu0 %441, %v384
        %v443 = vpop.permute.xlu0 %442
        %446 = vset.pattern.permute.xlu0 0
        %447 = vperm.xlu0 %446, %v385
        %v448 = vpop.permute.xlu0 %447
        %451 = vset.pattern.permute.xlu0 0
        %452 = vperm.xlu0 %451, %v386
        %v453 = vpop.permute.xlu0 %452
        %456 = vset.pattern.permute.xlu0 0
        %457 = vperm.xlu0 %456, %v387
        %v458 = vpop.permute.xlu0 %457
        %461 = vset.pattern.permute.xlu0 0
        %462 = vperm.xlu0 %461, %v388
        %v463 = vpop.permute.xlu0 %462
        %466 = vset.pattern.permute.xlu0 0
        %467 = vperm.xlu0 %466, %v389
        %v468 = vpop.permute.xlu0 %467
        %v486 = vunpack.c.l.b16 %v358
        %v487 = vunpack.c.l.b16 %v359
        %v488 = vunpack.c.l.b16 %v360
        %v489 = vunpack.c.l.b16 %v361
        %v490 = vunpack.c.l.b16 %v362
        %v491 = vunpack.c.l.b16 %v363
        %v492 = vunpack.c.l.b16 %v364
        %v493 = vunpack.c.l.b16 %v365
        %v494 = vunpack.c.l.b16 %v366
        %v495 = vunpack.c.l.b16 %v367
        %v496 = vunpack.c.l.b16 %v368
        %v497 = vunpack.c.l.b16 %v369
        %v498 = vunpack.c.l.b16 %v370
        %v499 = vunpack.c.l.b16 %v371
        %v500 = vunpack.c.l.b16 %v372
        %v501 = vunpack.c.l.b16 %v373
        %v502 = vpack.c.b16 %v487, %v486
        %v503 = vpack.c.b16 %v489, %v488
        %v504 = vpack.c.b16 %v491, %v490
        %v505 = vpack.c.b16 %v493, %v492
        %v506 = vpack.c.b16 %v495, %v494
        %v507 = vpack.c.b16 %v497, %v496
        %v508 = vpack.c.b16 %v499, %v498
        %v509 = vpack.c.b16 %v501, %v500
        %vm510 = vcmask 261120
        %v512 = vsel %vm510, %v502, 0
        %v515 = vsel %vm510, %v503, 0
        %v518 = vsel %vm510, %v504, 0
        %v521 = vsel %vm510, %v505, 0
        %v524 = vsel %vm510, %v506, 0
        %v527 = vsel %vm510, %v507, 0
        %v530 = vsel %vm510, %v508, 0
        %v533 = vsel %vm510, %v509, 0
        %v536 = vsel %vm510, %v350, 0
        %v539 = vsel %vm510, %v351, 0
        %v542 = vsel %vm510, %v352, 0
        %v545 = vsel %vm510, %v353, 0
        %v548 = vsel %vm510, %v354, 0
        %v551 = vsel %vm510, %v355, 0
        %v554 = vsel %vm510, %v356, 0
        %v557 = vsel %vm510, %v357, 0
        %559 = vmatpush.bf16.xpose.msra.mxu0 %v557
        %560 = vmatpush.bf16.xpose.msra.mxu0 %v554
        %561 = vmatpush.bf16.xpose.msra.mxu0 %v551
        %562 = vmatpush.bf16.xpose.msra.mxu0 %v548
        %563 = vmatpush.bf16.xpose.msra.mxu0 %v545
        %564 = vmatpush.bf16.xpose.msra.mxu0 %v542
        %565 = vmatpush.bf16.xpose.msra.mxu0 %v539
        %566 = vmatpush.bf16.xpose.msra.mxu0 %v536
        %567 = vmatmul.bf16.gmra.mxu0 %v512
        %v568 = vpop.f32.mrf.mxu0
        %v569 = vadd.f32 %v393, %v568
        %v570 = vpop.f32.mrf.mxu0
        %v571 = vadd.f32 %v398, %v570
        %572 = vmatmul.bf16.gmra.mxu0 %v515
        %v573 = vpop.f32.mrf.mxu0
        %v574 = vadd.f32 %v403, %v573
        %v575 = vpop.f32.mrf.mxu0
        %v576 = vadd.f32 %v408, %v575
        %577 = vmatmul.bf16.gmra.mxu0 %v518
        %v578 = vpop.f32.mrf.mxu0
        %v579 = vadd.f32 %v413, %v578
        %v580 = vpop.f32.mrf.mxu0
        %v581 = vadd.f32 %v418, %v580
        %582 = vmatmul.bf16.gmra.mxu0 %v521
        %v583 = vpop.f32.mrf.mxu0
        %v584 = vadd.f32 %v423, %v583
        %v585 = vpop.f32.mrf.mxu0
        %v586 = vadd.f32 %v428, %v585
        %587 = vmatmul.bf16.gmra.mxu0 %v524
        %v588 = vpop.f32.mrf.mxu0
        %v589 = vadd.f32 %v433, %v588
        %v590 = vpop.f32.mrf.mxu0
        %v591 = vadd.f32 %v438, %v590
        %592 = vmatmul.bf16.gmra.mxu0 %v527
        %v593 = vpop.f32.mrf.mxu0
        %v594 = vadd.f32 %v443, %v593
        %v595 = vpop.f32.mrf.mxu0
        %v596 = vadd.f32 %v448, %v595
        %597 = vmatmul.bf16.gmra.mxu0 %v530
        %v598 = vpop.f32.mrf.mxu0
        %v599 = vadd.f32 %v453, %v598
        %v600 = vpop.f32.mrf.mxu0
        %v601 = vadd.f32 %v458, %v600
        %602 = vmatmul.bf16.gmra.mxu0 %v533
        %v603 = vpop.f32.mrf.mxu0
        %v604 = vadd.f32 %v463, %v603
        %v605 = vpop.f32.mrf.mxu0
        %v606 = vadd.f32 %v468, %v605
        %607 = vdwg.mxu0
        %v608 = vmax.f32 %v569, 0.0
        %v609 = vmax.f32 %v571, 0.0
        %v610 = vmax.f32 %v574, 0.0
        %v611 = vmax.f32 %v576, 0.0
        %v612 = vmax.f32 %v579, 0.0
        %v613 = vmax.f32 %v581, 0.0
        %v614 = vmax.f32 %v584, 0.0
        %v615 = vmax.f32 %v586, 0.0
        %v616 = vmax.f32 %v589, 0.0
        %v617 = vmax.f32 %v591, 0.0
        %v618 = vmax.f32 %v594, 0.0
        %v619 = vmax.f32 %v596, 0.0
        %v620 = vmax.f32 %v599, 0.0
        %v621 = vmax.f32 %v601, 0.0
        %v622 = vmax.f32 %v604, 0.0
        %v623 = vmax.f32 %v606, 0.0
        %v624 = vld [vmem:[%s3] sm:$0xf]
        %v625 = vld [vmem:[%s3 + $0x4] sm:$0xf]
        %v626 = vld [vmem:[%s3 + $0x8] sm:$0xf]
        %v627 = vld [vmem:[%s3 + $0xc] sm:$0xf]
        %v628 = vld [vmem:[%s3 + $0x10] sm:$0xf]
        %v629 = vld [vmem:[%s3 + $0x14] sm:$0xf]
        %v630 = vld [vmem:[%s3 + $0x18] sm:$0xf]
        %v631 = vld [vmem:[%s3 + $0x1c] sm:$0xf]
        %v632 = vpack.c.bf16 %v609, %v608
        %v633 = vpack.c.bf16 %v611, %v610
        %v634 = vpack.c.bf16 %v613, %v612
        %v635 = vpack.c.bf16 %v615, %v614
        %v636 = vpack.c.bf16 %v617, %v616
        %v637 = vpack.c.bf16 %v619, %v618
        %v638 = vpack.c.bf16 %v621, %v620
        %v639 = vpack.c.bf16 %v623, %v622
        %v640 = vld [vmem:[%s4] sm:$0xff]
        %v641 = vld [vmem:[%s4 + $0x8] sm:$0xff]
        %v642 = vld [vmem:[%s4 + $0x10] sm:$0xff]
        %v643 = vld [vmem:[%s4 + $0x18] sm:$0xff]
        %v644 = vld [vmem:[%s4 + $0x20] sm:$0xff]
        %v645 = vld [vmem:[%s4 + $0x28] sm:$0xff]
        %v646 = vld [vmem:[%s4 + $0x30] sm:$0xff]
        %v647 = vld [vmem:[%s4 + $0x38] sm:$0xff]
        %649 = vset.pattern.permute.xlu0 0
        %650 = vperm.xlu0 %649, %v640
        %v651 = vpop.permute.xlu0 %650
        %654 = vset.pattern.permute.xlu0 0
        %655 = vperm.xlu0 %654, %v641
        %v656 = vpop.permute.xlu0 %655
        %659 = vset.pattern.permute.xlu0 0
        %660 = vperm.xlu0 %659, %v642
        %v661 = vpop.permute.xlu0 %660
        %664 = vset.pattern.permute.xlu0 0
        %665 = vperm.xlu0 %664, %v643
        %v666 = vpop.permute.xlu0 %665
        %669 = vset.pattern.permute.xlu0 0
        %670 = vperm.xlu0 %669, %v644
        %v671 = vpop.permute.xlu0 %670
        %674 = vset.pattern.permute.xlu0 0
        %675 = vperm.xlu0 %674, %v645
        %v676 = vpop.permute.xlu0 %675
        %679 = vset.pattern.permute.xlu0 0
        %680 = vperm.xlu0 %679, %v646
        %v681 = vpop.permute.xlu0 %680
        %684 = vset.pattern.permute.xlu0 0
        %685 = vperm.xlu0 %684, %v647
        %v686 = vpop.permute.xlu0 %685
        %v696 = vunpack.c.l.b16 %v624
        %v697 = vunpack.c.l.b16 %v625
        %v698 = vunpack.c.l.b16 %v626
        %v699 = vunpack.c.l.b16 %v627
        %v700 = vunpack.c.l.b16 %v628
        %v701 = vunpack.c.l.b16 %v629
        %v702 = vunpack.c.l.b16 %v630
        %v703 = vunpack.c.l.b16 %v631
        %v704 = vpack.c.b16 %v697, %v696
        %v705 = vpack.c.b16 %v699, %v698
        %v706 = vpack.c.b16 %v701, %v700
        %v707 = vpack.c.b16 %v703, %v702
        %712 = vmatpush.bf16.msra.mxu0 %v639
        %713 = vmatpush.bf16.msra.mxu0 %v638
        %714 = vmatpush.bf16.msra.mxu0 %v637
        %715 = vmatpush.bf16.msra.mxu0 %v636
        %716 = vmatpush.bf16.msra.mxu0 %v635
        %717 = vmatpush.bf16.msra.mxu0 %v634
        %718 = vmatpush.bf16.msra.mxu0 %v633
        %719 = vmatpush.bf16.msra.mxu0 %v632
        %720 = vmatmul.bf16.gmra.mxu0 %v704
        %v721 = vpop.f32.mrf.mxu0
        %v722 = vadd.f32 %v651, %v721
        %v723 = vpop.f32.mrf.mxu0
        %v724 = vadd.f32 %v656, %v723
        %725 = vmatmul.bf16.gmra.mxu0 %v705
        %v726 = vpop.f32.mrf.mxu0
        %v727 = vadd.f32 %v661, %v726
        %v728 = vpop.f32.mrf.mxu0
        %v729 = vadd.f32 %v666, %v728
        %730 = vmatmul.bf16.gmra.mxu0 %v706
        %v731 = vpop.f32.mrf.mxu0
        %v732 = vadd.f32 %v671, %v731
        %v733 = vpop.f32.mrf.mxu0
        %v734 = vadd.f32 %v676, %v733
        %735 = vmatmul.bf16.gmra.mxu0 %v707
        %v736 = vpop.f32.mrf.mxu0
        %v737 = vadd.f32 %v681, %v736
        %v738 = vpop.f32.mrf.mxu0
        %v739 = vadd.f32 %v686, %v738
        %740 = vdwg.mxu0
        %v741 = vmax.f32 %v722, 0.0
        %v742 = vmax.f32 %v724, 0.0
        %v743 = vmax.f32 %v727, 0.0
        %v744 = vmax.f32 %v729, 0.0
        %v745 = vmax.f32 %v732, 0.0
        %v746 = vmax.f32 %v734, 0.0
        %v747 = vmax.f32 %v737, 0.0
        %v748 = vmax.f32 %v739, 0.0
        %v749 = vld [vmem:[%s5] sm:$0xf]
        %v750 = vld [vmem:[%s5 + $0x4] sm:$0xf]
        %v751 = vld [vmem:[%s5 + $0x8] sm:$0xf]
        %v752 = vld [vmem:[%s5 + $0xc] sm:$0xf]
        %v753 = vpack.c.bf16 %v742, %v741
        %v754 = vpack.c.bf16 %v744, %v743
        %v755 = vpack.c.bf16 %v746, %v745
        %v756 = vpack.c.bf16 %v748, %v747
        %v757 = vld [vmem:[%s6] sm:$0xff]
        %v758 = vld [vmem:[%s6 + $0x8] sm:$0xff]
        %v759 = vld [vmem:[%s6 + $0x10] sm:$0xff]
        %v760 = vld [vmem:[%s6 + $0x18] sm:$0xff]
        %762 = vset.pattern.permute.xlu0 0
        %763 = vperm.xlu0 %762, %v757
        %v764 = vpop.permute.xlu0 %763
        %767 = vset.pattern.permute.xlu0 0
        %768 = vperm.xlu0 %767, %v758
        %v769 = vpop.permute.xlu0 %768
        %772 = vset.pattern.permute.xlu0 0
        %773 = vperm.xlu0 %772, %v759
        %v774 = vpop.permute.xlu0 %773
        %777 = vset.pattern.permute.xlu0 0
        %778 = vperm.xlu0 %777, %v760
        %v779 = vpop.permute.xlu0 %778
        %v785 = vunpack.c.l.b16 %v749
        %v786 = vunpack.c.l.b16 %v750
        %v787 = vunpack.c.l.b16 %v751
        %v788 = vunpack.c.l.b16 %v752
        %v789 = vpack.c.b16 %v786, %v785
        %v790 = vpack.c.b16 %v788, %v787
        %vm791 = vcmask 523264
        %v793 = vsel %vm791, %v789, 0
        %v796 = vsel %vm791, %v790, 0
        %798 = vmatpush.bf16.msra.mxu0 0
        %799 = vmatpush.bf16.msra.mxu0 0
        %800 = vmatpush.bf16.msra.mxu0 0
        %801 = vmatpush.bf16.msra.mxu0 0
        %802 = vmatpush.bf16.msra.mxu0 %v756
        %803 = vmatpush.bf16.msra.mxu0 %v755
        %804 = vmatpush.bf16.msra.mxu0 %v754
        %805 = vmatpush.bf16.msra.mxu0 %v753
        %806 = vmatmul.bf16.gmra.mxu0 %v793
        %v807 = vpop.f32.mrf.mxu0
        %v808 = vadd.f32 %v764, %v807
        %v809 = vpop.f32.mrf.mxu0
        %v810 = vadd.f32 %v769, %v809
        %811 = vmatmul.bf16.gmra.mxu0 %v796
        %v812 = vpop.f32.mrf.mxu0
        %v813 = vadd.f32 %v774, %v812
        %v814 = vpop.f32.mrf.mxu0
        %v815 = vadd.f32 %v779, %v814
        %816 = vdwg.mxu0
        %v817 = vmax.f32 %v808, 0.0
        %v818 = vmax.f32 %v810, 0.0
        %v819 = vmax.f32 %v813, 0.0
        %v820 = vmax.f32 %v815, 0.0
        %v821 = vld [vmem:[%s7] sm:$0xff]
        %v822 = vld [vmem:[%s7 + $0x8] sm:$0xff]
        %v823 = vld [vmem:[%s7 + $0x10] sm:$0xff]
        %v824 = vld [vmem:[%s7 + $0x18] sm:$0xff]
        %826 = vset.pattern.permute.xlu0 0
        %827 = vperm.xlu0 %826, %v821
        %v828 = vpop.permute.xlu0 %827
        %831 = vset.pattern.permute.xlu0 0
        %832 = vperm.xlu0 %831, %v822
        %v833 = vpop.permute.xlu0 %832
        %836 = vset.pattern.permute.xlu0 0
        %837 = vperm.xlu0 %836, %v823
        %v838 = vpop.permute.xlu0 %837
        %841 = vset.pattern.permute.xlu0 0
        %842 = vperm.xlu0 %841, %v824
        %v843 = vpop.permute.xlu0 %842
        %v845 = vmul.f32 %v828, %v817
        %v846 = vmul.f32 %v833, %v818
        %v847 = vmul.f32 %v838, %v819
        %v848 = vmul.f32 %v843, %v820
        %v849 = vadd.f32 %v845, %v846
        %v850 = vadd.f32 %v849, %v847
        %v851 = vadd.f32 %v850, %v848
        %v852 = vrot.slane %v851, 4
        %v853 = vadd.f32 %v851, %v852
        %v854 = vrot.slane %v853, 2
        %v855 = vadd.f32 %v853, %v854
        %v856 = vrot.slane %v855, 1
        %v857 = vadd.f32 %v855, %v856
        %s858 = sld [smem:[#allocation2]]
        %v859 = vstv %s858
        %v860 = vadd.f32 %v857, %v859
        %861 = vst [vmem:[%s326] sm:$0x1] %v860
        %s862 = sand.u32 %s226, 1
        %s863 = scalar_lea.sflag [#allocation4], %s862
        %s864 = sand.u32 %s226, 1
        %s865 = scalar_lea.vmem [#allocation3], %s864
        // Predicated region
        $region57: #{tpu_custom_call.1} parent=55 // pred_check
          %p866 = pneg %p236
        $region58: #{tpu_custom_call.1} parent=55 // pred_check_branch
          %868 = sbr.rel (%p866) target = $region60
        $region59: #{tpu_custom_call.1} parent=55 // pred_region
          %870 = vsyncadd %s863, 0
          %s871 = scalar_lea.hbm %s9, %s24
          %s873 = sshll.u32 %s865, 4
          %s874 = int_to_ptr.vmem [resolvable:$true] %s873
          %s875 = sshll.u32 %s871, 4
          %s876 = int_to_ptr.hbm [resolvable:$true] %s875
          %878 = dma.vmem_to_hbm [thread:$0]  %s874, 16, %s876, %s863
        $region60: #{tpu_custom_call.1} parent=55 // pred_fallthru
          _
      $region56: #{tpu_custom_call.1} parent=5 // pred_fallthru
        _
      %p879 = scmp.le.s32.totalorder 2, %s19
      // Predicated region
      $region61: #{tpu_custom_call.1} parent=5 // pred_check
        %p880 = pneg %p879
      $region62: #{tpu_custom_call.1} parent=5 // pred_check_branch
        %882 = sbr.rel (%p880) target = $region64
      $region63: #{tpu_custom_call.1} parent=5 // pred_region
        %s883 = ssub.s32 %s19, 2
        // Predicated region
        $region65: #{tpu_custom_call.1} parent=63 // pred_check
          %p884 = pneg %p242
        $region66: #{tpu_custom_call.1} parent=63 // pred_check_branch
          %886 = sbr.rel (%p884) target = $region68
        $region67: #{tpu_custom_call.1} parent=63 // pred_region
          %s887 = sand.u32 %s227, 1
          %s888 = scalar_lea.sflag [#allocation4], %s887
          %s889 = sand.u32 %s227, 1
          %s890 = scalar_lea.vmem [#allocation3], %s889
          %892 = dma.done %s888, 16
        $region68: #{tpu_custom_call.1} parent=63 // pred_fallthru
          _
      $region64: #{tpu_custom_call.1} parent=5 // pred_fallthru
        _
    $region6: #{tpu_custom_call.1} parent=1 // loop_footer
      %s23 = sadd.s32 1, %s19
    $region7: #{tpu_custom_call.1} parent=1 // loop_footer_branch
      %18 = sbr.rel target = $region3
    $region8: #{tpu_custom_call.1} parent=1 // loop_exit
      _
    %893 = vsyncpa [#allocation4], 1
    %s894 = scalar_lea.sflag [#allocation4], 1
    %895 = vsyncpa %s894, 1

</llo_original>
